<compile_context>
chip_gen: v7x
topology: tpu7x:2x2x1
jax: 0.10.0
libtpu: 0.0.40
codegen_flags: <defaults>
</compile_context>

<pallas_src>
import functools

import jax
import jax.numpy as jnp
from jax import lax
from jax.experimental import pallas as pl
from jax.experimental.pallas import tpu as pltpu

_LANE = 128      # vreg lane width (fast axis)
_SUBLANE = 8     # vreg sublane count (f32)

# Batch-tile cap, sized from the LANE-PADDED VMEM footprint so double-buffered
# pipelining survives v7x's 64 MiB/TC (v5e/v6e have 128 MiB):
#   x strip   (TB, 32) f32 -> TB * 128 * 4 B = 4 MiB   at TB = 8192
#   out strip (4, TB)  f32 -> 8 * TB * 4 B   = 256 KiB at TB = 8192
# Two buffers each -> ~8.5 MiB of pipelined VMEM, comfortably under budget.
_TB_CAP = 8192
_SMALL_BATCH = 256   # below this, a single full-batch block (block == array dims)


def _round_up(n, m):
    return ((n + m - 1) // m) * m


def _choose_batch_tile(batch):
    """Batch-tile rows: large tiles (amortize per-step pipeline overhead),
    >= 2 grid steps when batch is big enough (v7x: 2 TensorCores shard the
    "parallel" axis), and a multiple of 128 so the lane-dense (D_out, tb)
    output block stores with unmasked vst."""
    if batch <= _SMALL_BATCH:
        return batch
    n_steps = max(2, pl.cdiv(batch, _TB_CAP))
    tb = _round_up(pl.cdiv(batch, n_steps), _LANE)
    return min(tb, _TB_CAP)


def _vmem_limit_bytes(tb, input_dim, output_dim, x_itemsize):
    """Scoped-VMEM request derived from the lane/sublane-padded footprint of
    the double-buffered pipeline buffers (+50% and 4 MiB headroom), kept well
    under v7x's 64 MiB physical VMEM."""
    x_tile = tb * _round_up(input_dim, _LANE) * x_itemsize
    out_tile = _round_up(output_dim, _SUBLANE) * _round_up(tb, _LANE) * 4
    w_tile = _round_up(output_dim, _SUBLANE) * _round_up(input_dim, _LANE) * x_itemsize
    b_tile = _round_up(output_dim, _SUBLANE) * _LANE * 4
    pipelined = 2 * (x_tile + out_tile + w_tile + b_tile)
    limit = int(pipelined * 1.5) + (4 << 20)
    return max(16 << 20, min(limit, 48 << 20))


def _logreg_kernel(x_ref, w_ref, b_ref, o_ref):
    # One batch strip: NT contraction on the MXU producing LANE-DENSE logits
    # (D_out, TB) -- the large batch dim sits on the 128-lane axis so the
    # store is an unmasked vst and the out buffer is not 32x lane-padded.
    # Bias add (VPU) and sigmoid (EUP) run in f32 regardless of stream dtype.
    x = x_ref[...]                     # (TB, D_in)     f32 or bf16
    w = w_ref[...]                     # (D_out, D_in)  f32 or bf16 (PyTorch layout)
    b = b_ref[...]                     # (D_out, 1)     f32
    logits_t = lax.dot_general(
        w, x,
        dimension_numbers=(((1,), (1,)), ((), ())),   # contract both D_in dims
        preferred_element_type=jnp.float32,
    ) + b
    o_ref[...] = jax.nn.sigmoid(logits_t).astype(o_ref.dtype)


@functools.partial(jax.jit, static_argnames="stream_dtype")
def logistic_regression_forward(x, weight, bias, *, stream_dtype=None):
    """sigmoid(x @ weight.T + bias), matching torch.nn.Linear + torch.sigmoid.

    x:      (batch, input_dim)      float32
    weight: (output_dim, input_dim) float32   (PyTorch convention, fed as-is)
    bias:   (output_dim,)           float32
    stream_dtype: optional dtype (e.g. jnp.bfloat16) for streaming x/weight;
                  accumulation, bias add and sigmoid stay float32.
    returns (batch, output_dim)     float32
    """
    batch, input_dim = x.shape
    output_dim = weight.shape[0]

    if stream_dtype is not None:
        x = x.astype(stream_dtype)
        weight = weight.astype(stream_dtype)
    b2 = bias.astype(jnp.float32).reshape(output_dim, 1)   # (D_out, 1) — glue only

    tb = _choose_batch_tile(batch)
    grid = (pl.cdiv(batch, tb),)
    x_itemsize = x.dtype.itemsize

    cost = pl.CostEstimate(
        flops=2 * batch * input_dim * output_dim,
        transcendentals=batch * output_dim,                       # sigmoid exp
        bytes_accessed=(x_itemsize * batch * input_dim
                        + x_itemsize * input_dim * output_dim
                        + 4 * output_dim
                        + 4 * batch * output_dim),
    )

    out_t = pl.pallas_call(
        _logreg_kernel,
        out_shape=jax.ShapeDtypeStruct((output_dim, batch), jnp.float32),
        grid_spec=pltpu.PrefetchScalarGridSpec(
            num_scalar_prefetch=0,
            grid=grid,
            in_specs=[
                pl.BlockSpec((tb, input_dim), lambda i: (i, 0)),          # x strip
                pl.BlockSpec((output_dim, input_dim), lambda i: (0, 0)),  # weight (resident)
                pl.BlockSpec((output_dim, 1), lambda i: (0, 0)),          # bias   (resident)
            ],
            out_specs=pl.BlockSpec((output_dim, tb), lambda i: (0, i)),   # lane-dense out
        ),
        compiler_params=pltpu.CompilerParams(
            dimension_semantics=("parallel",),
            vmem_limit_bytes=_vmem_limit_bytes(tb, input_dim, output_dim, x_itemsize),
        ),
        cost_estimate=cost,
    )(x, weight, b2)

    return out_t.T                       # back to the (batch, output_dim) contract


def init_params(key, input_dim, output_dim):
    """Deterministic init mimicking torch.nn.Linear default (uniform +-1/sqrt(fan_in))."""
    kw, kb = jax.random.split(key)
    bound = 1.0 / (input_dim ** 0.5)
    weight = jax.random.uniform(
        kw, (output_dim, input_dim), jnp.float32, minval=-bound, maxval=bound
    )
    bias = jax.random.uniform(
        kb, (output_dim,), jnp.float32, minval=-bound, maxval=bound
    )
    return weight, bias


if __name__ == "__main__":
    key = jax.random.PRNGKey(0)
    k_x, k_p, k_x2, k_x3, k_x4 = jax.random.split(key, 5)

    input_dim, output_dim = 32, 4
    weight, bias = init_params(k_p, input_dim, output_dim)

    def ref_fn(xx):
        return jax.nn.sigmoid(xx @ weight.T + bias)

    # 1) Small batch: single full-batch block (batch <= 256 path).
    x = jax.random.normal(k_x, (8, input_dim), jnp.float32)
    out = jax.block_until_ready(logistic_regression_forward(x, weight, bias))
    assert out.shape == (8, output_dim)
    assert jnp.allclose(out, ref_fn(x), atol=1e-5, rtol=1e-5)

    # 2) Multi-step path: batch > 256 -> >= 2 grid steps (tb = 512 here),
    #    resident weight/bias, lane-dense transposed output.
    x2 = jax.random.normal(k_x2, (1024, input_dim), jnp.float32)
    out2 = jax.block_until_ready(logistic_regression_forward(x2, weight, bias))
    assert out2.shape == (1024, output_dim)
    assert jnp.allclose(out2, ref_fn(x2), atol=1e-5, rtol=1e-5)

    # 3) Ragged last tile: batch not a multiple of the 512-row tile.
    x3 = jax.random.normal(k_x3, (777, input_dim), jnp.float32)
    out3 = jax.block_until_ready(logistic_regression_forward(x3, weight, bias))
    assert out3.shape == (777, output_dim)
    assert jnp.allclose(out3, ref_fn(x3), atol=1e-5, rtol=1e-5)

    # 4) bf16 streaming of x/weight (halves HBM traffic); f32 accumulate +
    #    f32 bias/sigmoid, so only a small tolerance loosening is needed.
    x4 = jax.random.normal(k_x4, (2048, input_dim), jnp.float32)
    out4 = jax.block_until_ready(
        logistic_regression_forward(x4, weight, bias, stream_dtype=jnp.bfloat16))
    assert out4.shape == (2048, output_dim)
    assert jnp.allclose(out4, ref_fn(x4), atol=1e-2, rtol=1e-2)

    print("KERNEL_OK")
</pallas_src>

<mosaic_0001>
module attributes {stable_mosaic.version = 11 : i64} {
  func.func @_logreg_kernel(%arg0: i32, %arg1: memref<8x32xf32, #tpu.memory_space<vmem>>, %arg2: memref<4x32xf32, #tpu.memory_space<vmem>>, %arg3: memref<4x1xf32, #tpu.memory_space<vmem>>, %arg4: memref<4x8xf32, #tpu.memory_space<vmem>>) attributes {dimension_semantics = [#tpu.dimension_semantics<parallel>], iteration_bounds = array<i64: 1>, scalar_prefetch = 0 : i64, scratch_operands = 0 : i64, tpu.core_type = #tpu.core_type<tc>, window_params = [{transform_indices = @transform_0, window_bounds = array<i64: 8, 32>}, {pipeline_mode = #tpu.pipeline_mode<synchronous>, transform_indices = @transform_1, window_bounds = array<i64: 4, 32>}, {pipeline_mode = #tpu.pipeline_mode<synchronous>, transform_indices = @transform_2, window_bounds = array<i64: 4, 1>}, {transform_indices = @transform_3, window_bounds = array<i64: 4, 8>}]} {
    %c0 = arith.constant 0 : index
    %c0_0 = arith.constant 0 : index
    %0 = vector.load %arg1[%c0, %c0_0] : memref<8x32xf32, #tpu.memory_space<vmem>>, vector<8x32xf32>
    %c0_1 = arith.constant 0 : index
    %c0_2 = arith.constant 0 : index
    %1 = vector.load %arg2[%c0_1, %c0_2] : memref<4x32xf32, #tpu.memory_space<vmem>>, vector<4x32xf32>
    %c0_3 = arith.constant 0 : index
    %c0_4 = arith.constant 0 : index
    %2 = vector.load %arg3[%c0_3, %c0_4] : memref<4x1xf32, #tpu.memory_space<vmem>>, vector<4x1xf32>
    %cst = arith.constant dense<0.000000e+00> : vector<4x8xf32>
    %3 = tpu.matmul %1, %0, %cst {dimension_numbers = #tpu.dot_dimension_numbers<[1], [1], [0], [0], [0, 0, 1, 0], [], []>} : vector<4x32xf32>, vector<8x32xf32>, vector<4x8xf32> -> vector<4x8xf32>
    %4 = vector.broadcast %2 : vector<4x1xf32> to vector<4x8xf32>
    %5 = arith.addf %3, %4 : vector<4x8xf32>
    %6 = arith.negf %5 : vector<4x8xf32>
    %7 = math.exp %6 : vector<4x8xf32>
    %cst_5 = arith.constant 1.000000e+00 : f32
    %8 = vector.broadcast %cst_5 : f32 to vector<4x8xf32>
    %9 = arith.addf %8, %7 : vector<4x8xf32>
    %10 = arith.divf %8, %9 : vector<4x8xf32>
    %c0_6 = arith.constant 0 : index
    %c0_7 = arith.constant 0 : index
    %11 = vector.load %arg4[%c0_6, %c0_7] : memref<4x8xf32, #tpu.memory_space<vmem>>, vector<4x8xf32>
    tpu.vector_store %arg4[%c0_6, %c0_7], %10 {strides = array<i32>} : memref<4x8xf32, #tpu.memory_space<vmem>>, vector<4x8xf32>,
    return
  }
  func.func @transform_0(%arg0: i32) -> (i32, i32) {
    %c0_i32 = arith.constant 0 : i32
    %c0_i32_0 = arith.constant 0 : i32
    return %arg0, %c0_i32 : i32, i32
  }
  func.func @transform_1(%arg0: i32) -> (i32, i32) {
    %c0_i32 = arith.constant 0 : i32
    %c0_i32_0 = arith.constant 0 : i32
    %c0_i32_1 = arith.constant 0 : i32
    return %c0_i32, %c0_i32_0 : i32, i32
  }
  func.func @transform_2(%arg0: i32) -> (i32, i32) {
    %c0_i32 = arith.constant 0 : i32
    %c0_i32_0 = arith.constant 0 : i32
    %c0_i32_1 = arith.constant 0 : i32
    return %c0_i32, %c0_i32_0 : i32, i32
  }
  func.func @transform_3(%arg0: i32) -> (i32, i32) {
    %c0_i32 = arith.constant 0 : i32
    %c0_i32_0 = arith.constant 0 : i32
    return %c0_i32, %arg0 : i32, i32
  }
}

</mosaic_0001>

<llo_original>
// kernel: logistic_regression_forward.1
$region0: #{logistic_regression_forward.1}
  #allocation0 [shape = 'u32[]', space=smem, size = 0x4, offset = 0x4, fixed_abs, tag = 'smem constant byte address 0x4 - core index']
  #allocation1 [shape = 'u32[144,128]{1,0:T(1,128)}', space=vmem, size = 0x12000, scoped, tag = 'internal scratch']
  %s0 = inlined_call_operand.vmem [shape: f32[8,32], index: 0, kind: input, shape index: {}]
  %s1 = inlined_call_operand.vmem [shape: f32[4,32], index: 1, kind: input, shape index: {}]
  %s2 = inlined_call_operand.vmem [shape: f32[4,1], index: 2, kind: input, shape index: {}]
  %s3 = inlined_call_operand.hbm [shape: f32[4,8], index: 3, kind: output, shape index: {}]
  %s4 = sld [smem:[#allocation0]]
  $region22: #{logistic_regression_forward.1} parent=0
    _
  %s6 = ssub.s32 1, %s4
  %s7 = scalar_select 0, %s6, %s4
  $region1: #{logistic_regression_forward.1} parent=0
    #allocation2 [shape = 'u8[2048]{0}', space=vmem, size = 0x800, scoped, tag = 'output window, operand 0, single buffered']
    #allocation3 [shape = 's32[1]{0}', space=sflag, size = 0x4, scoped, tag = 'scoped memory for logistic_regression_forward.1']
    %8 = vsyncpa [#allocation3], 0
    // Predicated region
    $region2: #{logistic_regression_forward.1} parent=1 // pred_check
      _
    $region3: #{logistic_regression_forward.1} parent=1 // pred_check_branch
      %10 = sbr.rel (0) target = $region5
    $region4: #{logistic_regression_forward.1} parent=1 // pred_region
      _
    $region5: #{logistic_regression_forward.1} parent=1 // pred_fallthru
      _
    // Predicated region
    $region6: #{logistic_regression_forward.1} parent=1 // pred_check
      _
    $region7: #{logistic_regression_forward.1} parent=1 // pred_check_branch
      %12 = sbr.rel (0) target = $region9
    $region8: #{logistic_regression_forward.1} parent=1 // pred_region
      _
    $region9: #{logistic_regression_forward.1} parent=1 // pred_fallthru
      _
    // Predicated region
    $region10: #{logistic_regression_forward.1} parent=1 // pred_check
      _
    $region11: #{logistic_regression_forward.1} parent=1 // pred_check_branch
      %14 = sbr.rel (0) target = $region13
    $region12: #{logistic_regression_forward.1} parent=1 // pred_region
      _
    $region13: #{logistic_regression_forward.1} parent=1 // pred_fallthru
      _
    %v15 = vld [vmem:[%s0] sm:$0xff]
    %v16 = vld [vmem:[%s1] sm:$0xf]
    %v17 = vld [vmem:[%s2] sm:$0xf]
    %19 = vset.pattern.permute.xlu0 0
    %20 = vperm.xlu0 %19, %v17
    %v21 = vpop.permute.xlu0 %20
    %vm23 = vcmask 261120
    %v25 = vsel %vm23, %v16, 0
    %v28 = vsel %vm23, %v15, 0
    %30 = vmatprep.subr.mxu0 0.0
    %31 = vmatpush1.xpose.msra.mxu0 %v28
    %32 = vmatprep.subr.mxu0 0.0
    %33 = vmatpush1.xpose.msra.mxu0 0.0
    %34 = vmatprep.subr.mxu0 0.0
    %35 = vmatpush1.xpose.msra.mxu0 0.0
    %36 = vmatprep.subr.mxu0 0.0
    %37 = vmatpush1.xpose.msra.mxu0 0.0
    %38 = vmatprep.subr.mxu0 0.0
    %39 = vmatpush1.xpose.msra.mxu0 0.0
    %40 = vmatprep.subr.mxu0 0.0
    %41 = vmatpush1.xpose.msra.mxu0 0.0
    %42 = vmatprep.subr.mxu0 0.0
    %43 = vmatpush1.xpose.msra.mxu0 0.0
    %44 = vmatprep.subr.mxu0 0.0
    %45 = vmatpush1.xpose.msra.mxu0 0.0
    %46 = vmatprep.subr.mxu0 0.0
    %47 = vmatpush1.xpose.msra.mxu0 0.0
    %48 = vmatprep.subr.mxu0 0.0
    %49 = vmatpush1.xpose.msra.mxu0 0.0
    %50 = vmatprep.subr.mxu0 0.0
    %51 = vmatpush1.xpose.msra.mxu0 0.0
    %52 = vmatprep.subr.mxu0 0.0
    %53 = vmatpush1.xpose.msra.mxu0 0.0
    %54 = vmatprep.subr.mxu0 0.0
    %55 = vmatpush1.xpose.msra.mxu0 0.0
    %56 = vmatprep.subr.mxu0 0.0
    %57 = vmatpush1.xpose.msra.mxu0 0.0
    %58 = vmatprep.subr.mxu0 0.0
    %59 = vmatpush1.xpose.msra.mxu0 0.0
    %60 = vmatprep.subr.mxu0 0.0
    %61 = vmatpush1.xpose.msra.mxu0 0.0
    %62 = vmatprep.subr.mxu0 0.0
    %63 = vmatpush1.xpose.msra.mxu0 0.0
    %64 = vmatprep.subr.mxu0 0.0
    %65 = vmatpush1.xpose.msra.mxu0 0.0
    %66 = vmatprep.subr.mxu0 0.0
    %67 = vmatpush1.xpose.msra.mxu0 0.0
    %68 = vmatprep.subr.mxu0 0.0
    %69 = vmatpush1.xpose.msra.mxu0 0.0
    %70 = vmatprep.subr.mxu0 0.0
    %71 = vmatpush1.xpose.msra.mxu0 0.0
    %72 = vmatprep.subr.mxu0 0.0
    %73 = vmatpush1.xpose.msra.mxu0 0.0
    %74 = vmatprep.subr.mxu0 0.0
    %75 = vmatpush1.xpose.msra.mxu0 0.0
    %76 = vmatprep.subr.mxu0 0.0
    %77 = vmatpush1.xpose.msra.mxu0 0.0
    %78 = vmatprep.subr.mxu0 0.0
    %79 = vmatpush1.xpose.msra.mxu0 0.0
    %80 = vmatprep.subr.mxu0 0.0
    %81 = vmatpush1.xpose.msra.mxu0 0.0
    %82 = vmatprep.subr.mxu0 0.0
    %83 = vmatpush1.xpose.msra.mxu0 0.0
    %84 = vmatprep.subr.mxu0 0.0
    %85 = vmatpush1.xpose.msra.mxu0 0.0
    %86 = vmatprep.subr.mxu0 0.0
    %87 = vmatpush1.xpose.msra.mxu0 0.0
    %88 = vmatprep.subr.mxu0 0.0
    %89 = vmatpush1.xpose.msra.mxu0 0.0
    %90 = vmatprep.subr.mxu0 0.0
    %91 = vmatpush1.xpose.msra.mxu0 0.0
    %92 = vmatprep.subr.mxu0 0.0
    %93 = vmatpush1.xpose.msra.mxu0 0.0
    %94 = vmatprep.mubr.f32.mxu0 0.0
    %95 = vmatmul.mubr.f32.gmra.mrb[0].mxu0 %v25
    %v96 = vpop.f32.mrb[0].mxu0
    %v97 = vadd.f32 %v21, %v96
    %v98 = vpop.f32.mrb[0].mxu0
    %99 = vdwg.mxu0
    %v100 = vxor.u32 %v97, 2147483648
    %v101 = vmul.f32 %v100, 1.442695
    %v102 = vpow.pop %v101
    %v103 = vadd.f32 %v102, 1.0
    %v104 = vrcp.pop %v103
    %v105 = vmul.f32 1.0, %v104
    %vm106 = vcmask 60416
    %107 = vst.msk [vmem:[#allocation2] sm:$0xf] %vm106, %v105
    // Predicated region
    $region14: #{logistic_regression_forward.1} parent=1 // pred_check
      _
    $region15: #{logistic_regression_forward.1} parent=1 // pred_check_branch
      %109 = sbr.rel (0) target = $region17
    $region16: #{logistic_regression_forward.1} parent=1 // pred_region
      %s111 = ssub.s32 64, 64
      %112 = vsyncadd [#allocation3], %s111
      %s114 = sshll.u32 [#allocation2], 4
      %s115 = int_to_ptr.vmem [resolvable:$true] %s114
      %117 = dma.vmem_to_hbm [thread:$0]  %s115, 64, %s3, [#allocation3]
    $region17: #{logistic_regression_forward.1} parent=1 // pred_fallthru
      _
    // Predicated region
    $region18: #{logistic_regression_forward.1} parent=1 // pred_check
      _
    $region19: #{logistic_regression_forward.1} parent=1 // pred_check_branch
      %119 = sbr.rel (0) target = $region21
    $region20: #{logistic_regression_forward.1} parent=1 // pred_region
      %120 = dma.done [#allocation3], 64
    $region21: #{logistic_regression_forward.1} parent=1 // pred_fallthru
      _
    %121 = vsyncpa [#allocation3], 1

</llo_original>
